<compile_context>
chip_gen: v6e
topology: v6e:2x2x1
jax: 0.10.0
libtpu: 0.0.40
codegen_flags: <defaults>
</compile_context>

<pallas_src>
import functools

import jax
import jax.numpy as jnp
from jax.experimental import pallas as pl
from jax.experimental.pallas import tpu as pltpu


def _prod(xs):
    p = 1
    for s in xs:
        p *= int(s)
    return p


def _round_up(x, m):
    return (x + m - 1) // m * m


def _cdiv(a, b):
    return -(-a // b)


# ---------------------------------------------------------------------------
# Kernels
# ---------------------------------------------------------------------------

def _lg_kernel_single_k(x_ref, w_ref, b_ref, o_ref):
    """Single K step: no accumulator scratch, fused bias add + store."""
    acc = jnp.dot(x_ref[...], w_ref[...], preferred_element_type=jnp.float32)
    o_ref[...] = (acc + b_ref[...].astype(jnp.float32)).astype(o_ref.dtype)


def _lg_kernel_multi_k(x_ref, w_ref, b_ref, o_ref, acc_ref):
    """K-tiled reduction with a resident f32 VMEM accumulator."""
    k = pl.program_id(2)
    prod = jnp.dot(x_ref[...], w_ref[...], preferred_element_type=jnp.float32)

    @pl.when(k == 0)
    def _():
        acc_ref[...] = prod          # direct write: no zero-init round trip

    @pl.when(k != 0)
    def _():
        acc_ref[...] += prod

    @pl.when(k == pl.num_programs(2) - 1)
    def _():
        o_ref[...] = (acc_ref[...] + b_ref[...].astype(jnp.float32)).astype(o_ref.dtype)


# ---------------------------------------------------------------------------
# Tiling / VMEM sizing
# ---------------------------------------------------------------------------

def _pick_tiles(M, K, N, compute_itemsize):
    """Tile sizes (tm, tk, tn) and padded K.

    Lane dims are multiples of 128 or the full dim; sublane dims are multiples
    of 16 or the full dim.  Tiles are sized to use a large fraction of the
    scoped VMEM budget (cuts HBM re-streaming and per-step grid overhead).
    """
    # --- K (contraction: lane dim of x / sublane dim of weight) ---
    if K <= 1024:
        tk, Kp = K, K                        # single K step, no padding
    else:
        Kp = _round_up(K, 128)
        tk = 128
        for cand in range(1024, 127, -128):  # largest 128-multiple divisor of Kp
            if Kp % cand == 0:
                tk = cand
                break

    # --- N (lane dim of weight / bias / output) ---
    cap_n = 1024 if compute_itemsize <= 2 else 512
    if N <= cap_n:
        tn = N                               # full dim: single block, no masking
    else:
        Np128 = _round_up(N, 128)
        tn = 128
        for cand in range(cap_n, 127, -128):
            if Np128 % cand == 0:
                tn = cand
                break

    # --- M (sublane dim of x / output) ---
    if M <= 512:
        tm = M                               # full dim (single block)
    else:
        tm = 512                             # 256-aligned; ragged edge block masked

    # v7x megacore: keep >=2 blocks on a parallel axis when there is enough
    # work for both TensorCores (a (1,1,K) grid serializes on one core).
    if _cdiv(M, tm) * _cdiv(N, tn) < 2:
        if M >= 128:
            half = max(16, _round_up(_cdiv(M, 2), 16))
            if _cdiv(M, half) >= 2:
                tm = half
        elif N >= 256:
            half = max(128, _round_up(_cdiv(N, 2), 128))
            if _cdiv(N, half) >= 2:
                tn = half

    return tm, tk, tn, Kp


def _vmem_limit_bytes(vmem_needed):
    try:
        vmem_phys = pltpu.get_tpu_info().vmem_capacity_bytes
    except Exception:                         # noqa: BLE001 - conservative fallback
        vmem_phys = 64 * 1024 * 1024          # v7x has the smallest per-core VMEM
    cap = (vmem_phys * 3) // 4                # leave headroom for internal scratch
    want = max(2 * vmem_needed, 32 * 1024 * 1024)
    return int(min(want, cap))


# ---------------------------------------------------------------------------
# Wrapper
# ---------------------------------------------------------------------------

def _linear_general_impl(x, weight, bias, dims, compute_dtype):
    x_dims, w_dims = dims
    assert len(x_dims) == 1 and len(w_dims) == 1, "only single-axis contraction supported"
    assert x_dims[0] in (x.ndim - 1, -1), "only contraction over last axis of x supported"
    assert w_dims[0] == 0, "only contraction over first axis of weight supported"
    # TODO(synk): general multi-axis tensordot `dims` would need a transpose/reshape
    # canonicalization pass; the ViT module only ever uses dims=([-1], [0]).

    K = x.shape[-1]
    assert weight.shape[0] == K, (weight.shape, K)
    batch_shape = x.shape[:-1]
    feat_shape = weight.shape[1:]
    M = _prod(batch_shape)
    N = _prod(feat_shape)

    out_dtype = x.dtype

    x2 = x.reshape(M, K)
    w2 = weight.reshape(K, N)
    b2 = bias.reshape(1, N)

    if compute_dtype is not None:
        # bf16-native MXU fast path (v6e/v7x); accumulation stays f32 in-kernel.
        x2 = x2.astype(compute_dtype)
        w2 = w2.astype(compute_dtype)

    compute_itemsize = jnp.dtype(x2.dtype).itemsize
    tm, tk, tn, Kp = _pick_tiles(M, K, N, compute_itemsize)

    # Zero-pad K only when unavoidable (K > 1024 and not a 128-multiple).  M/N
    # ragged edges are handled by Pallas masked edge blocks, so there is no
    # host-side pad of the activation nor an output slice round-trip.
    if Kp != K:
        x2 = jnp.pad(x2, ((0, 0), (0, Kp - K)))
        w2 = jnp.pad(w2, ((0, Kp - K), (0, 0)))

    mb, nb, kb = _cdiv(M, tm), _cdiv(N, tn), Kp // tk

    xb = jnp.dtype(x2.dtype).itemsize
    wb = jnp.dtype(w2.dtype).itemsize
    bb = jnp.dtype(b2.dtype).itemsize
    ob = jnp.dtype(out_dtype).itemsize

    vmem_needed = 2 * (tm * tk * xb + tk * tn * wb + tn * bb + tm * tn * ob)
    if kb > 1:
        vmem_needed += tm * tn * 4            # f32 accumulator scratch
    vmem_limit = _vmem_limit_bytes(vmem_needed)

    cost = pl.CostEstimate(
        flops=2 * M * N * Kp,
        transcendentals=0,
        bytes_accessed=(M * Kp * xb) * nb + (Kp * N * wb) * mb
        + N * bb * mb + M * N * ob,
    )

    if kb == 1:
        out2 = pl.pallas_call(
            _lg_kernel_single_k,
            out_shape=jax.ShapeDtypeStruct((M, N), out_dtype),
            grid=(mb, nb),
            in_specs=[
                pl.BlockSpec((tm, tk), lambda i, j: (i, 0)),
                pl.BlockSpec((tk, tn), lambda i, j: (0, j)),
                pl.BlockSpec((1, tn), lambda i, j: (0, j)),
            ],
            out_specs=pl.BlockSpec((tm, tn), lambda i, j: (i, j)),
            compiler_params=pltpu.CompilerParams(
                dimension_semantics=("parallel", "parallel"),
                vmem_limit_bytes=vmem_limit,
            ),
            cost_estimate=cost,
        )(x2, w2, b2)
    else:
        out2 = pl.pallas_call(
            _lg_kernel_multi_k,
            out_shape=jax.ShapeDtypeStruct((M, N), out_dtype),
            grid=(mb, nb, kb),
            in_specs=[
                pl.BlockSpec((tm, tk), lambda i, j, k: (i, k)),
                pl.BlockSpec((tk, tn), lambda i, j, k: (k, j)),
                pl.BlockSpec((1, tn), lambda i, j, k: (0, j)),
            ],
            out_specs=pl.BlockSpec((tm, tn), lambda i, j, k: (i, j)),
            scratch_shapes=[pltpu.VMEM((tm, tn), jnp.float32)],
            compiler_params=pltpu.CompilerParams(
                dimension_semantics=("parallel", "parallel", "arbitrary"),
                vmem_limit_bytes=vmem_limit,
            ),
            cost_estimate=cost,
        )(x2, w2, b2)

    return out2.reshape(*batch_shape, *feat_shape)


_linear_general_jit = functools.partial(
    jax.jit, static_argnames=("dims", "compute_dtype")
)(_linear_general_impl)


def linear_general(x, weight, bias, dims=((2,), (0,)), compute_dtype=None):
    """Pallas TPU implementation of LinearGeneral.forward(x, dims).

    `compute_dtype=jnp.bfloat16` casts x / weight for the MXU (2-3x faster on
    bf16-native v6e/v7x MXUs); accumulation stays float32 and the output keeps
    x.dtype.  Default (None) computes in the input dtype.
    """
    x_dims = tuple(int(d) for d in dims[0])
    w_dims = tuple(int(d) for d in dims[1])
    return _linear_general_jit(x, weight, bias, dims=(x_dims, w_dims),
                               compute_dtype=compute_dtype)


# ---------------------------------------------------------------------------
# Self-test
# ---------------------------------------------------------------------------

if __name__ == "__main__":
    key = jax.random.PRNGKey(0)
    kx, kw, kb, kx2, kw2, kb2 = jax.random.split(key, 6)

    # --- Test 1: small shapes consistent with the module, f32, single-K kernel ---
    B, S, D = 2, 8, 32
    H, Hd = 4, 16
    x = jax.random.normal(kx, (B, S, D), dtype=jnp.float32)
    weight = jax.random.normal(kw, (D, H, Hd), dtype=jnp.float32)
    bias = 0.1 * jax.random.normal(kb, (H, Hd), dtype=jnp.float32)

    out = jax.block_until_ready(linear_general(x, weight, bias, dims=((2,), (0,))))
    ref = jnp.tensordot(x, weight, axes=((2,), (0,)),
                        precision=jax.lax.Precision.HIGHEST) + bias
    assert out.shape == (B, S, H, Hd), out.shape
    assert jnp.allclose(out, ref, atol=1e-4, rtol=1e-4), float(jnp.max(jnp.abs(out - ref)))

    # --- Test 2: multi-block (M, N, K) grid, ragged M edge, multi-K kernel, f32 ---
    B2, S2, D2 = 4, 150, 1152
    H2, Hd2 = 5, 128
    x_big = jax.random.normal(kx2, (B2, S2, D2), dtype=jnp.float32)
    w_big = jax.random.normal(kw2, (D2, H2, Hd2), dtype=jnp.float32) / jnp.sqrt(D2)
    b_big = 0.1 * jax.random.normal(kb2, (H2, Hd2), dtype=jnp.float32)

    out2 = jax.block_until_ready(linear_general(x_big, w_big, b_big, dims=((2,), (0,))))
    ref2 = jnp.tensordot(x_big, w_big, axes=((2,), (0,)),
                         precision=jax.lax.Precision.HIGHEST) + b_big
    assert out2.shape == (B2, S2, H2, Hd2), out2.shape
    assert jnp.allclose(out2, ref2, atol=5e-3, rtol=5e-3), \
        float(jnp.max(jnp.abs(out2 - ref2)))

    # --- Test 3: bf16 inputs (fast MXU path), ViT-sized, single-K kernel ---------
    B3, S3, D3 = 2, 197, 768
    H3, Hd3 = 12, 64
    x3 = jax.random.normal(kx, (B3, S3, D3), dtype=jnp.float32)
    w3 = jax.random.normal(kw, (D3, H3, Hd3), dtype=jnp.float32) / jnp.sqrt(D3)
    b3 = 0.1 * jax.random.normal(kb, (H3, Hd3), dtype=jnp.float32)
    x3b = x3.astype(jnp.bfloat16)
    w3b = w3.astype(jnp.bfloat16)
    b3b = b3.astype(jnp.bfloat16)

    out3 = jax.block_until_ready(linear_general(x3b, w3b, b3b, dims=((2,), (0,))))
    ref3 = jnp.tensordot(x3b.astype(jnp.float32), w3b.astype(jnp.float32),
                         axes=((2,), (0,)),
                         precision=jax.lax.Precision.HIGHEST) + b3b.astype(jnp.float32)
    assert out3.shape == (B3, S3, H3, Hd3), out3.shape
    assert jnp.allclose(out3.astype(jnp.float32), ref3, atol=5e-2, rtol=2e-2), \
        float(jnp.max(jnp.abs(out3.astype(jnp.float32) - ref3)))

    # --- Test 4: f32 inputs with compute_dtype=bf16 (v6e/v7x fast path) ----------
    out4 = jax.block_until_ready(
        linear_general(x, weight, bias, dims=((2,), (0,)), compute_dtype=jnp.bfloat16))
    ref4 = jnp.tensordot(x.astype(jnp.bfloat16).astype(jnp.float32),
                         weight.astype(jnp.bfloat16).astype(jnp.float32),
                         axes=((2,), (0,)),
                         precision=jax.lax.Precision.HIGHEST) + bias
    assert out4.shape == (B, S, H, Hd), out4.shape
    assert jnp.allclose(out4, ref4, atol=1e-2, rtol=1e-2), \
        float(jnp.max(jnp.abs(out4 - ref4)))

    print("KERNEL_OK")
</pallas_src>

<mosaic_0001>
module attributes {stable_mosaic.version = 11 : i64} {
  func.func @_lg_kernel_single_k(%arg0: i32, %arg1: i32, %arg2: memref<16x32xf32, #tpu.memory_space<vmem>>, %arg3: memref<32x64xf32, #tpu.memory_space<vmem>>, %arg4: memref<1x64xf32, #tpu.memory_space<vmem>>, %arg5: memref<16x64xf32, #tpu.memory_space<vmem>>) attributes {dimension_semantics = [#tpu.dimension_semantics<parallel>, #tpu.dimension_semantics<parallel>], iteration_bounds = array<i64: 1, 1>, scalar_prefetch = 0 : i64, scratch_operands = 0 : i64, tpu.core_type = #tpu.core_type<tc>, window_params = [{transform_indices = @transform_0, window_bounds = array<i64: 16, 32>}, {transform_indices = @transform_1, window_bounds = array<i64: 32, 64>}, {transform_indices = @transform_2, window_bounds = array<i64: 1, 64>}, {transform_indices = @transform_3, window_bounds = array<i64: 16, 64>}]} {
    %c0 = arith.constant 0 : index
    %c0_0 = arith.constant 0 : index
    %0 = vector.load %arg2[%c0, %c0_0] : memref<16x32xf32, #tpu.memory_space<vmem>>, vector<16x32xf32>
    %c0_1 = arith.constant 0 : index
    %c0_2 = arith.constant 0 : index
    %1 = vector.load %arg3[%c0_1, %c0_2] : memref<32x64xf32, #tpu.memory_space<vmem>>, vector<32x64xf32>
    %cst = arith.constant dense<0.000000e+00> : vector<16x64xf32>
    %2 = tpu.matmul %0, %1, %cst {dimension_numbers = #tpu.dot_dimension_numbers<[1], [0], [0], [1], [0, 0, 1, 1], [], []>} : vector<16x32xf32>, vector<32x64xf32>, vector<16x64xf32> -> vector<16x64xf32>
    %c0_3 = arith.constant 0 : index
    %c0_4 = arith.constant 0 : index
    %3 = vector.load %arg4[%c0_3, %c0_4] : memref<1x64xf32, #tpu.memory_space<vmem>>, vector<1x64xf32>
    %4 = vector.broadcast %3 : vector<1x64xf32> to vector<16x64xf32>
    %5 = arith.addf %2, %4 : vector<16x64xf32>
    %c0_5 = arith.constant 0 : index
    %c0_6 = arith.constant 0 : index
    %6 = vector.load %arg5[%c0_5, %c0_6] : memref<16x64xf32, #tpu.memory_space<vmem>>, vector<16x64xf32>
    tpu.vector_store %arg5[%c0_5, %c0_6], %5 {strides = array<i32>} : memref<16x64xf32, #tpu.memory_space<vmem>>, vector<16x64xf32>,
    return
  }
  func.func @transform_0(%arg0: i32, %arg1: i32) -> (i32, i32) {
    %c0_i32 = arith.constant 0 : i32
    %c0_i32_0 = arith.constant 0 : i32
    return %arg0, %c0_i32 : i32, i32
  }
  func.func @transform_1(%arg0: i32, %arg1: i32) -> (i32, i32) {
    %c0_i32 = arith.constant 0 : i32
    %c0_i32_0 = arith.constant 0 : i32
    return %c0_i32, %arg1 : i32, i32
  }
  func.func @transform_2(%arg0: i32, %arg1: i32) -> (i32, i32) {
    %c0_i32 = arith.constant 0 : i32
    %c0_i32_0 = arith.constant 0 : i32
    return %c0_i32, %arg1 : i32, i32
  }
  func.func @transform_3(%arg0: i32, %arg1: i32) -> (i32, i32) {
    %c0_i32 = arith.constant 0 : i32
    return %arg0, %arg1 : i32, i32
  }
}

</mosaic_0001>

<llo_original>
// kernel: _linear_general_impl.1
$region0: #{_linear_general_impl.1}
  #allocation0 [shape = 'u32[]', space=smem, size = 0x4, offset = 0x4, fixed_abs, tag = 'smem constant byte address 0x4 - core index']
  #allocation1 [shape = 'u32[144,128]{1,0:T(1,128)}', space=vmem, size = 0x12000, scoped, tag = 'internal scratch']
  %s0 = inlined_call_operand.vmem [shape: f32[16,32], index: 0, kind: input, shape index: {}]
  %s1 = inlined_call_operand.vmem [shape: f32[32,64], index: 1, kind: input, shape index: {}]
  %s2 = inlined_call_operand.vmem [shape: f32[1,64], index: 2, kind: input, shape index: {}]
  %s3 = inlined_call_operand.vmem [shape: f32[16,64], index: 3, kind: output, shape index: {}]
  %s4 = sld [smem:[#allocation0]]
  $region22: #{_linear_general_impl.1} parent=0
    _
  %s6 = ssub.s32 1, %s4
  %s7 = scalar_select 0, %s6, %s4
  // Predicated region
  $region2: #{_linear_general_impl.1} parent=0 // pred_check
    _
  $region3: #{_linear_general_impl.1} parent=0 // pred_check_branch
    %9 = sbr.rel (0) target = $region5
  $region4: #{_linear_general_impl.1} parent=0 // pred_region
    _
  $region5: #{_linear_general_impl.1} parent=0 // pred_fallthru
    _
  // Predicated region
  $region6: #{_linear_general_impl.1} parent=0 // pred_check
    _
  $region7: #{_linear_general_impl.1} parent=0 // pred_check_branch
    %11 = sbr.rel (0) target = $region9
  $region8: #{_linear_general_impl.1} parent=0 // pred_region
    _
  $region9: #{_linear_general_impl.1} parent=0 // pred_fallthru
    _
  // Predicated region
  $region10: #{_linear_general_impl.1} parent=0 // pred_check
    _
  $region11: #{_linear_general_impl.1} parent=0 // pred_check_branch
    %13 = sbr.rel (0) target = $region13
  $region12: #{_linear_general_impl.1} parent=0 // pred_region
    _
  $region13: #{_linear_general_impl.1} parent=0 // pred_fallthru
    _
  %v14 = vld [vmem:[%s0] sm:$0xff]
  %v15 = vld [vmem:[%s0 + $0x8] sm:$0xff]
  %v16 = vld [vmem:[%s1] sm:$0xff]
  %v17 = vld [vmem:[%s1 + $0x8] sm:$0xff]
  %v18 = vld [vmem:[%s1 + $0x10] sm:$0xff]
  %v19 = vld [vmem:[%s1 + $0x18] sm:$0xff]
  %v20 = vld [vmem:[%s2] sm:$0x1]
  %v22 = vlaneseq
  %v23 = vshrl.u32 %v22, 7
  %v24 = vsub.s32 0, %v23
  %v25 = vrot.slane %v20, %v24
  %vm27 = vcmask 261120
  %v29 = vsel %vm27, %v14, 0
  %v32 = vsel %vm27, %v15, 0
  %34 = vmatprep.subr.mxu0 0.0
  %35 = vmatpush1.msra.mxu0 0.0
  %36 = vmatprep.subr.mxu0 0.0
  %37 = vmatpush1.msra.mxu0 0.0
  %38 = vmatprep.subr.mxu0 0.0
  %39 = vmatpush1.msra.mxu0 0.0
  %40 = vmatprep.subr.mxu0 0.0
  %41 = vmatpush1.msra.mxu0 0.0
  %42 = vmatprep.subr.mxu0 0.0
  %43 = vmatpush1.msra.mxu0 0.0
  %44 = vmatprep.subr.mxu0 0.0
  %45 = vmatpush1.msra.mxu0 0.0
  %46 = vmatprep.subr.mxu0 0.0
  %47 = vmatpush1.msra.mxu0 0.0
  %48 = vmatprep.subr.mxu0 0.0
  %49 = vmatpush1.msra.mxu0 0.0
  %50 = vmatprep.subr.mxu0 0.0
  %51 = vmatpush1.msra.mxu0 0.0
  %52 = vmatprep.subr.mxu0 0.0
  %53 = vmatpush1.msra.mxu0 0.0
  %54 = vmatprep.subr.mxu0 0.0
  %55 = vmatpush1.msra.mxu0 0.0
  %56 = vmatprep.subr.mxu0 0.0
  %57 = vmatpush1.msra.mxu0 0.0
  %58 = vmatprep.subr.mxu0 0.0
  %59 = vmatpush1.msra.mxu0 %v19
  %60 = vmatprep.subr.mxu0 0.0
  %61 = vmatpush1.msra.mxu0 %v18
  %62 = vmatprep.subr.mxu0 0.0
  %63 = vmatpush1.msra.mxu0 %v17
  %64 = vmatprep.subr.mxu0 0.0
  %65 = vmatpush1.msra.mxu0 %v16
  %66 = vmatprep.subr.mxu0 0.0
  %67 = vmatpush2.msra.mxu0 0.0
  %68 = vmatprep.subr.mxu0 0.0
  %69 = vmatpush2.msra.mxu0 0.0
  %70 = vmatprep.subr.mxu0 0.0
  %71 = vmatpush2.msra.mxu0 0.0
  %72 = vmatprep.subr.mxu0 0.0
  %73 = vmatpush2.msra.mxu0 0.0
  %74 = vmatprep.subr.mxu0 0.0
  %75 = vmatpush2.msra.mxu0 0.0
  %76 = vmatprep.subr.mxu0 0.0
  %77 = vmatpush2.msra.mxu0 0.0
  %78 = vmatprep.subr.mxu0 0.0
  %79 = vmatpush2.msra.mxu0 0.0
  %80 = vmatprep.subr.mxu0 0.0
  %81 = vmatpush2.msra.mxu0 0.0
  %82 = vmatprep.subr.mxu0 0.0
  %83 = vmatpush2.msra.mxu0 0.0
  %84 = vmatprep.subr.mxu0 0.0
  %85 = vmatpush2.msra.mxu0 0.0
  %86 = vmatprep.subr.mxu0 0.0
  %87 = vmatpush2.msra.mxu0 0.0
  %88 = vmatprep.subr.mxu0 0.0
  %89 = vmatpush2.msra.mxu0 0.0
  %90 = vmatprep.subr.mxu0 0.0
  %91 = vmatpush2.msra.mxu0 0.0
  %92 = vmatprep.subr.mxu0 0.0
  %93 = vmatpush2.msra.mxu0 0.0
  %94 = vmatprep.subr.mxu0 0.0
  %95 = vmatpush2.msra.mxu0 0.0
  %96 = vmatprep.subr.mxu0 0.0
  %97 = vmatpush2.msra.mxu0 0.0
  %98 = vmatprep.mubr.f32.mxu0 0.0
  %99 = vmatmul.mubr.f32.gmra.mxu0 %v29
  %v100 = vpop.f32.mrf.mxu0
  %v101 = vadd.f32 %v25, %v100
  %v102 = vpop.f32.mrf.mxu0
  %103 = vmatprep.mubr.f32.mxu0 0.0
  %104 = vmatmul.mubr.f32.gmra.mxu0 %v32
  %v105 = vpop.f32.mrf.mxu0
  %v106 = vadd.f32 %v25, %v105
  %v107 = vpop.f32.mrf.mxu0
  %108 = vdwg.mxu0
  %vm109 = vcmask 523264
  %110 = vst.msk [vmem:[%s3] sm:$0xff] %vm109, %v101
  %111 = vst.msk [vmem:[%s3 + $0x8] sm:$0xff] %vm109, %v106
  // Predicated region
  $region14: #{_linear_general_impl.1} parent=0 // pred_check
    _
  $region15: #{_linear_general_impl.1} parent=0 // pred_check_branch
    %113 = sbr.rel (0) target = $region17
  $region16: #{_linear_general_impl.1} parent=0 // pred_region
    _
  $region17: #{_linear_general_impl.1} parent=0 // pred_fallthru
    _
  // Predicated region
  $region18: #{_linear_general_impl.1} parent=0 // pred_check
    _
  $region19: #{_linear_general_impl.1} parent=0 // pred_check_branch
    %115 = sbr.rel (0) target = $region21
  $region20: #{_linear_general_impl.1} parent=0 // pred_region
    _
  $region21: #{_linear_general_impl.1} parent=0 // pred_fallthru
    _

</llo_original>
